<compile_context>
chip_gen: v7x
topology: tpu7x:2x2x1
jax: 0.10.0
libtpu: 0.0.40
codegen_flags: <defaults>
</compile_context>

<pallas_src>
import jax
import jax.numpy as jnp
from jax.experimental import pallas as pl
from jax.experimental.pallas import tpu as pltpu

_LANE = 128      # vreg lane width
_SUBLANE = 8     # vreg sublane count for 32-bit dtypes


def _linear1x1_kernel(x_ref, w_ref, b_ref, o_ref):
    # x_ref: (block_rows, 128) tile in VMEM;  w_ref, b_ref: (1,) SMEM scalars.
    # Single VPU multiply-add, lane-dense unmasked store.
    o_ref[...] = x_ref[...] * w_ref[0] + b_ref[0]


def linear_pallas(x, weight, bias, *, max_block_rows=4096,
                  min_pallas_elements=65536):
    """y = x @ weight.T + bias, matching torch.nn.Linear(1, 1) semantics."""
    n, in_features = x.shape
    out_features, in_features_w = weight.shape
    # Specialized for the degenerate 1->1 linear of this module.
    # TODO(synk): general (M,K)x(K,N) sizes need an MXU path (3-D grid, f32
    # accumulator scratch, pl.when init/finalize on the K axis).
    assert in_features == 1 and in_features_w == 1 and out_features == 1

    # Small-batch bypass: wrapper copies + fixed kernel cost cannot beat one
    # fused XLA elementwise op at tiny sizes.
    if n < min_pallas_elements:
        return x * weight.reshape(()) + bias.reshape(())

    # Sublane multiple depends on dtype packing (f32: 8, bf16: 16, int8: 32).
    sub = _SUBLANE * (4 // jnp.dtype(x.dtype).itemsize)
    tile_elems = sub * _LANE

    # Lane-dense layout: flatten the batch onto (rows, 128).  Pad only to the
    # next multiple of sub*128 (minimal copy; none when n already aligns).
    flat = x.reshape(-1)
    padded_len = pl.cdiv(n, tile_elems) * tile_elems
    padded = padded_len != n
    if padded:
        flat = jnp.pad(flat, (0, padded_len - n))
    rows = padded_len // _LANE                      # multiple of `sub`
    x2d = flat.reshape(rows, _LANE)

    # Block size: as large as reasonable (amortize the per-step overhead), but
    # keep >= 2 grid steps when there is more than one sublane group so the
    # "parallel" axis can shard across v7x's two TensorCores.
    block_rows = min(max(max_block_rows, sub), rows)
    if rows > sub:
        half_rows = pl.cdiv(pl.cdiv(rows, 2), sub) * sub
        block_rows = min(block_rows, half_rows)
    block_rows = max((block_rows // sub) * sub, sub)

    grid = (pl.cdiv(rows, block_rows),)             # tail block may be partial

    y2d = pl.pallas_call(
        _linear1x1_kernel,
        out_shape=jax.ShapeDtypeStruct((rows, _LANE), x.dtype),
        grid=grid,
        in_specs=[
            pl.BlockSpec((block_rows, _LANE), lambda i: (i, 0)),
            pl.BlockSpec(memory_space=pltpu.MemorySpace.SMEM),
            pl.BlockSpec(memory_space=pltpu.MemorySpace.SMEM),
        ],
        out_specs=pl.BlockSpec((block_rows, _LANE), lambda i: (i, 0)),
        # If we had to materialize a padded copy anyway, reuse that buffer for
        # the output instead of allocating a second HBM slab.
        input_output_aliases=({0: 0} if padded else {}),
        compiler_params=pltpu.CompilerParams(
            dimension_semantics=("parallel",)),
    )(x2d, weight.reshape(1), bias.reshape(1))

    y = y2d.reshape(-1)
    if padded:
        y = y[:n]
    return y.reshape(n, out_features)


if __name__ == "__main__":
    key = jax.random.PRNGKey(0)
    kx, kw, kb = jax.random.split(key, 3)

    in_features = 1
    out_features = 1

    # Deterministic "parameters" (same shapes as torch.nn.Linear(1, 1)).
    weight = jax.random.uniform(
        kw, (out_features, in_features), dtype=jnp.float32, minval=-1.0, maxval=1.0)
    bias = jax.random.uniform(
        kb, (out_features,), dtype=jnp.float32, minval=-1.0, maxval=1.0)

    def ref(x):
        return x @ weight.T + bias

    # 1) Tiny batch (the module's typical use): auto path takes the fused-XLA
    #    bypass, which is strictly faster than Pallas at this size.
    x_small = jax.random.normal(kx, (8, in_features), dtype=jnp.float32)
    y_small = linear_pallas(x_small, weight, bias)

    # 2) Same tiny batch forced through the Pallas kernel (compile/run check).
    y_small_pl = linear_pallas(x_small, weight, bias, min_pallas_elements=0)

    # 3) Non-aligned batch exercising minimal padding, a 2-step parallel grid
    #    and the input->output aliasing path (small max_block_rows on purpose).
    x_mid = jax.random.normal(kx, (10_000, in_features), dtype=jnp.float32)
    y_mid = linear_pallas(x_mid, weight, bias,
                          max_block_rows=64, min_pallas_elements=0)

    jax.block_until_ready((y_small, y_small_pl, y_mid))

    assert y_small.shape == (8, out_features)
    assert jnp.allclose(y_small, ref(x_small), atol=1e-5, rtol=1e-5)
    assert y_small_pl.shape == (8, out_features)
    assert jnp.allclose(y_small_pl, ref(x_small), atol=1e-5, rtol=1e-5)
    assert y_mid.shape == (10_000, out_features)
    assert jnp.allclose(y_mid, ref(x_mid), atol=1e-5, rtol=1e-5)

    print("KERNEL_OK")
</pallas_src>

<mosaic_0001>
module attributes {stable_mosaic.version = 11 : i64} {
  func.func @_linear1x1_kernel(%arg0: i32, %arg1: memref<8x128xf32, #tpu.memory_space<vmem>>, %arg2: memref<1xf32, #tpu.memory_space<smem>>, %arg3: memref<1xf32, #tpu.memory_space<smem>>, %arg4: memref<8x128xf32, #tpu.memory_space<vmem>>) attributes {dimension_semantics = [#tpu.dimension_semantics<parallel>], iteration_bounds = array<i64: 1>, scalar_prefetch = 0 : i64, scratch_operands = 0 : i64, tpu.core_type = #tpu.core_type<tc>, window_params = [{transform_indices = @transform_0, window_bounds = array<i64: 8, 128>}, {transform_indices = @transform_1, window_bounds = array<i64: 1>}, {transform_indices = @transform_2, window_bounds = array<i64: 1>}, {transform_indices = @transform_3, window_bounds = array<i64: 8, 128>}]} {
    %c0 = arith.constant 0 : index
    %c0_0 = arith.constant 0 : index
    %0 = vector.load %arg1[%c0, %c0_0] : memref<8x128xf32, #tpu.memory_space<vmem>>, vector<8x128xf32>
    %c0_1 = arith.constant 0 : index
    %1 = memref.load %arg2[%c0_1] : memref<1xf32, #tpu.memory_space<smem>>
    %2 = vector.broadcast %1 : f32 to vector<8x128xf32>
    %3 = arith.mulf %0, %2 : vector<8x128xf32>
    %c0_2 = arith.constant 0 : index
    %4 = memref.load %arg3[%c0_2] : memref<1xf32, #tpu.memory_space<smem>>
    %5 = vector.broadcast %4 : f32 to vector<8x128xf32>
    %6 = arith.addf %3, %5 : vector<8x128xf32>
    %c0_3 = arith.constant 0 : index
    %c0_4 = arith.constant 0 : index
    %7 = vector.load %arg4[%c0_3, %c0_4] : memref<8x128xf32, #tpu.memory_space<vmem>>, vector<8x128xf32>
    tpu.vector_store %arg4[%c0_3, %c0_4], %6 {strides = array<i32>} : memref<8x128xf32, #tpu.memory_space<vmem>>, vector<8x128xf32>,
    return
  }
  func.func @transform_0(%arg0: i32) -> (i32, i32) {
    %c0_i32 = arith.constant 0 : i32
    %c0_i32_0 = arith.constant 0 : i32
    return %arg0, %c0_i32 : i32, i32
  }
  func.func @transform_1(%arg0: i32) -> i32 {
    %c0_i32 = arith.constant 0 : i32
    %c0_i32_0 = arith.constant 0 : i32
    return %c0_i32 : i32
  }
  func.func @transform_2(%arg0: i32) -> i32 {
    %c0_i32 = arith.constant 0 : i32
    %c0_i32_0 = arith.constant 0 : i32
    return %c0_i32 : i32
  }
  func.func @transform_3(%arg0: i32) -> (i32, i32) {
    %c0_i32 = arith.constant 0 : i32
    %c0_i32_0 = arith.constant 0 : i32
    return %arg0, %c0_i32 : i32, i32
  }
}

</mosaic_0001>

<llo_original>
// kernel: tpu_custom_call.1
$region0: #{tpu_custom_call.1}
  #allocation0 [shape = 'u32[]', space=smem, size = 0x4, offset = 0x4, fixed_abs, tag = 'smem constant byte address 0x4 - core index']
  #allocation1 [shape = 'u32[144,128]{1,0:T(1,128)}', space=vmem, size = 0x12000, scoped, tag = 'internal scratch']
  #allocation2 [shape = 'f32[1]{0:T(128)S(6)}', space=smem, size = 0x200, scoped, tag = 'scoped memory for tpu_custom_call.1']
  #allocation3 [shape = 'f32[1]{0:T(128)S(6)}', space=smem, size = 0x200, scoped, tag = 'scoped memory for tpu_custom_call.1']
  %s0 = inlined_call_operand.hbm [shape: f32[8,128], index: 0, kind: input, shape index: {}, may-alias: {0,3}]
  %s1 = inlined_call_operand.<no memory space> [shape: f32[1], index: 1, kind: input, shape index: {}]
  %s2 = inlined_call_operand.<no memory space> [shape: f32[1], index: 2, kind: input, shape index: {}]
  %s3 = inlined_call_operand.hbm [shape: f32[8,128], index: 3, kind: output, shape index: {}, may-alias: {0,3}]
  %s4 = sld [smem:[#allocation0]]
  $region26: #{tpu_custom_call.1} parent=0
    _
  %s6 = ssub.s32 1, %s4
  %s7 = scalar_select 0, %s6, %s4
  %8 = sst [smem:[#allocation2]] %s1
  %9 = sst [smem:[#allocation3]] %s2
  $region1: #{tpu_custom_call.1} parent=0
    #allocation4 [shape = 'u8[4096]{0}', space=vmem, size = 0x1000, scoped, tag = 'input window, operand 0, single buffered']
    #allocation5 [shape = 's32[1]{0}', space=sflag, size = 0x4, scoped, tag = 'scoped memory for tpu_custom_call.1']
    #allocation6 [shape = 's32[1]{0}', space=sflag, size = 0x4, scoped, tag = 'scoped memory for tpu_custom_call.1']
    #allocation7 [shape = 'u8[4096]{0}', space=vmem, size = 0x1000, scoped, tag = 'output window, operand 0, single buffered']
    %10 = vsyncpa [#allocation5], 0
    %11 = vsyncpa [#allocation6], 0
    // Predicated region
    $region2: #{tpu_custom_call.1} parent=1 // pred_check
      _
    $region3: #{tpu_custom_call.1} parent=1 // pred_check_branch
      %13 = sbr.rel (0) target = $region5
    $region4: #{tpu_custom_call.1} parent=1 // pred_region
      %s15 = ssub.s32 128, 128
      %16 = vsyncadd [#allocation5], %s15
      %s18 = sshll.u32 [#allocation4], 4
      %s19 = int_to_ptr.vmem [resolvable:$true] %s18
      %21 = dma.hbm_to_vmem [thread:$0]  %s0, 128, %s19, [#allocation5]
    $region5: #{tpu_custom_call.1} parent=1 // pred_fallthru
      _
    // Predicated region
    $region6: #{tpu_custom_call.1} parent=1 // pred_check
      _
    $region7: #{tpu_custom_call.1} parent=1 // pred_check_branch
      %23 = sbr.rel (0) target = $region9
    $region8: #{tpu_custom_call.1} parent=1 // pred_region
      _
    $region9: #{tpu_custom_call.1} parent=1 // pred_fallthru
      _
    // Predicated region
    $region10: #{tpu_custom_call.1} parent=1 // pred_check
      _
    $region11: #{tpu_custom_call.1} parent=1 // pred_check_branch
      %25 = sbr.rel (0) target = $region13
    $region12: #{tpu_custom_call.1} parent=1 // pred_region
      _
    $region13: #{tpu_custom_call.1} parent=1 // pred_fallthru
      _
    // Predicated region
    $region14: #{tpu_custom_call.1} parent=1 // pred_check
      _
    $region15: #{tpu_custom_call.1} parent=1 // pred_check_branch
      %27 = sbr.rel (0) target = $region17
    $region16: #{tpu_custom_call.1} parent=1 // pred_region
      %28 = dma.done [#allocation5], 128
    $region17: #{tpu_custom_call.1} parent=1 // pred_fallthru
      _
    %v29 = vld [vmem:[#allocation4] sm:$0xff]
    %s30 = sld [smem:[#allocation2]]
    %v31 = vstv %s30
    %v32 = vmul.f32 %v29, %v31
    %s33 = sld [smem:[#allocation3]]
    %v34 = vstv %s33
    %v35 = vadd.f32 %v32, %v34
    %36 = vst [vmem:[#allocation7] sm:$0xff] %v35
    // Predicated region
    $region18: #{tpu_custom_call.1} parent=1 // pred_check
      _
    $region19: #{tpu_custom_call.1} parent=1 // pred_check_branch
      %38 = sbr.rel (0) target = $region21
    $region20: #{tpu_custom_call.1} parent=1 // pred_region
      %s40 = ssub.s32 128, 128
      %41 = vsyncadd [#allocation6], %s40
      %s43 = sshll.u32 [#allocation7], 4
      %s44 = int_to_ptr.vmem [resolvable:$true] %s43
      %46 = dma.vmem_to_hbm [thread:$0]  %s44, 128, %s3, [#allocation6]
    $region21: #{tpu_custom_call.1} parent=1 // pred_fallthru
      _
    // Predicated region
    $region22: #{tpu_custom_call.1} parent=1 // pred_check
      _
    $region23: #{tpu_custom_call.1} parent=1 // pred_check_branch
      %48 = sbr.rel (0) target = $region25
    $region24: #{tpu_custom_call.1} parent=1 // pred_region
      %49 = dma.done [#allocation6], 128
    $region25: #{tpu_custom_call.1} parent=1 // pred_fallthru
      _
    %50 = vsyncpa [#allocation5], 1
    %51 = vsyncpa [#allocation6], 1

</llo_original>
